<compile_context>
chip_gen: v7x
topology: tpu7x:2x2x1
jax: 0.10.0
libtpu: 0.0.40
codegen_flags: <defaults>
</compile_context>

<pallas_src>
import functools

import jax
import jax.numpy as jnp
from jax.experimental import pallas as pl
from jax.experimental.pallas import tpu as pltpu


def _round_up(x, m):
    return ((x + m - 1) // m) * m


def _sublane(dtype):
    # sublane multiple per dtype: bf16 packs 2 rows/sublane, int8/fp8 pack 4.
    return {4: 8, 2: 16, 1: 32}.get(jnp.dtype(dtype).itemsize, 8)


def _vmem_limit_bytes():
    """Generation-aware VMEM budget: ~48 MiB on v7x (64 MiB), ~96 MiB on v5e/v6e."""
    cap = 64 * 1024 * 1024
    try:
        info = pltpu.get_tpu_info()
        cap = int(getattr(info, "vmem_capacity_bytes", cap))
    except Exception:
        pass
    return int(min(cap * 3 // 4, 96 * 1024 * 1024))


# -----------------------------------------------------------------------------
# Main kernel: CE + MSE partial sums, accumulated into resident output blocks.
# Grid = (num_splits, tiles_per_split); split axis is "parallel" (dual-TC on v7x),
# tile axis is the "arbitrary" batch reduction.
# -----------------------------------------------------------------------------
def _bbloss_ce_kernel(
    labels_ref,   # (TN, 1)  int32   VMEM batch tile
    logits_ref,   # (TN, C)  native  VMEM batch tile
    preds_ref,    # (TN, K)  native  VMEM batch tile
    tgts_ref,     # (TN, K)  native  VMEM batch tile
    ce_out_ref,   # (TN, 1)  f32     resident per-split accumulator (output)
    mse_out_ref,  # (TN, K)  f32     resident per-split accumulator (output)
    *,
    n_valid,          # true batch size N (python int)
    block_n,          # rows per tile (python int)
    tiles_per_split,  # inner-grid extent (python int)
    needs_mask,       # python bool: some rows of some tiles are out of bounds
):
    c_id = pl.program_id(0)
    i = pl.program_id(1)

    @pl.when(i == 0)
    def _init():
        ce_out_ref[...] = jnp.zeros_like(ce_out_ref)
        mse_out_ref[...] = jnp.zeros_like(mse_out_ref)

    # ---- cross-entropy per-row values for this batch tile ----
    logits = logits_ref[...].astype(jnp.float32)         # (TN, C)
    labels = labels_ref[...]                             # (TN, 1) int32
    tn, nc = logits.shape

    m = jnp.max(logits, axis=-1, keepdims=True)                       # (TN, 1)
    shifted = logits - m                                              # (TN, C)
    lse = jnp.log(jnp.sum(jnp.exp(shifted), axis=-1, keepdims=True))  # (TN, 1)
    col = jax.lax.broadcasted_iota(jnp.int32, (tn, nc), 1)
    tgt_logit = jnp.sum(
        jnp.where(col == labels, shifted, 0.0), axis=-1, keepdims=True)
    per_row = lse - tgt_logit                                         # (TN, 1)

    # ---- squared error for this batch tile ----
    diff = preds_ref[...].astype(jnp.float32) - tgts_ref[...].astype(jnp.float32)
    sq = diff * diff                                                  # (TN, K)

    if needs_mask:
        # Row mask uses the *unclamped* tile index so partial and phantom tiles
        # contribute exactly zero (where-before-sum keeps garbage/NaN out).
        tile = c_id * tiles_per_split + i
        row = tile * block_n + jax.lax.broadcasted_iota(jnp.int32, (tn, 1), 0)
        valid = row < n_valid
        per_row = jnp.where(valid, per_row, 0.0)
        sq = jnp.where(valid, sq, 0.0)

    # Plain VPU adds into resident output blocks; no per-step reduce / SMEM RMW.
    ce_out_ref[...] += per_row
    mse_out_ref[...] += sq


# -----------------------------------------------------------------------------
# use_ce=False branch: tiled MSE(yp, yt) with a resident-output accumulator.
# -----------------------------------------------------------------------------
def _mse_only_kernel(a_ref, b_ref, acc_ref, *, rows_valid, needs_mask):
    i = pl.program_id(0)

    @pl.when(i == 0)
    def _init():
        acc_ref[...] = jnp.zeros_like(acc_ref)

    diff = a_ref[...].astype(jnp.float32) - b_ref[...].astype(jnp.float32)
    sq = diff * diff
    if needs_mask:
        tr = sq.shape[0]
        row = i * tr + jax.lax.broadcasted_iota(jnp.int32, (tr, 1), 0)
        sq = jnp.where(row < rows_valid, sq, 0.0)
    acc_ref[...] += sq


def _mse_only(yp, yt, block_rows=None):
    count = int(yp.size)
    lanes = 128
    rows = pl.cdiv(count, lanes)
    pad = rows * lanes - count

    a = yp.reshape(-1)
    b = yt.reshape(-1)
    if pad:  # only materialize a padded copy when the flat size isn't lane-aligned
        a = jnp.pad(a, (0, pad))
        b = jnp.pad(b, (0, pad))
    a = a.reshape(rows, lanes)
    b = b.reshape(rows, lanes)

    vmem_limit = _vmem_limit_bytes()
    sublane = max(_sublane(a.dtype), _sublane(b.dtype), 8)
    bytes_per_row = lanes * (jnp.dtype(a.dtype).itemsize + jnp.dtype(b.dtype).itemsize)

    if block_rows is None:
        block_rows = (4 * 1024 * 1024) // bytes_per_row      # ~2 MiB per operand buffer
    max_rows = (vmem_limit * 3 // 5) // (2 * bytes_per_row + 1024)
    block_rows = min(int(block_rows), max_rows, _round_up(rows, sublane))
    block_rows = max(sublane, (block_rows // sublane) * sublane)

    grid = pl.cdiv(rows, block_rows)
    needs_mask = (grid * block_rows != rows)

    kernel = functools.partial(_mse_only_kernel, rows_valid=rows, needs_mask=needs_mask)
    acc = pl.pallas_call(
        kernel,
        out_shape=jax.ShapeDtypeStruct((block_rows, lanes), jnp.float32),
        grid_spec=pltpu.PrefetchScalarGridSpec(
            num_scalar_prefetch=0,
            grid=(grid,),
            in_specs=[
                pl.BlockSpec((block_rows, lanes), lambda i: (i, 0)),
                pl.BlockSpec((block_rows, lanes), lambda i: (i, 0)),
            ],
            out_specs=pl.BlockSpec((block_rows, lanes), lambda i: (0, 0)),
        ),
        compiler_params=pltpu.CompilerParams(
            dimension_semantics=("arbitrary",),
            vmem_limit_bytes=vmem_limit,
        ),
    )(a, b)
    return jnp.sum(acc) / jnp.float32(count)


# -----------------------------------------------------------------------------
# Public wrapper (matches BBLoss.forward semantics).
# -----------------------------------------------------------------------------
def bb_loss(yp, yt, alphas=(1.0, 1.0), use_ce=True, block_n=None):
    """JAX/Pallas equivalent of BBLoss.forward(yp, yt)."""
    alphas = jnp.asarray(alphas, dtype=jnp.float32).reshape(2)

    if not use_ce:
        return _mse_only(yp, yt)

    logits, preds = yp                        # native dtype (e.g. bf16) — no wrapper upcast
    n, c = logits.shape
    preds = preds.reshape(n, -1)
    k = preds.shape[1]

    labels = yt[:, 0].astype(jnp.int32).reshape(n, 1)    # (N, 1) int32
    if k > 0:
        tgts = yt[:, 1:]                                 # (N, K), native dtype
        preds_in = preds
        kk = k
    else:
        # k == 0 guard: no regression targets -> MSE term skipped in the epilogue.
        tgts = jnp.zeros((n, 1), dtype=logits.dtype)
        preds_in = jnp.zeros((n, 1), dtype=logits.dtype)
        kk = 1

    vmem_limit = _vmem_limit_bytes()
    itemsize = jnp.dtype(logits.dtype).itemsize
    sublane = max(_sublane(logits.dtype), _sublane(preds_in.dtype),
                  _sublane(tgts.dtype), 8)

    # Bytes streamed per batch row per pipeline buffer (logits + labels + preds + tgts).
    row_stream_bytes = (c * itemsize + 4
                        + kk * jnp.dtype(preds_in.dtype).itemsize
                        + kk * jnp.dtype(tgts.dtype).itemsize)
    # f32 accumulators are narrow but pad to full 128-lane tiles: ~512 B/row each,
    # counted with double buffering.
    row_acc_bytes = 2048

    if block_n is None:
        tile_bytes = 2 * 1024 * 1024          # 1-4 MiB logits tile sweet spot
        block_n = tile_bytes // max(1, c * itemsize)
        block_n = min(block_n, 8192)          # bound padding of 1-lane-wide per-row buffers
    block_n = int(block_n)
    max_rows = (vmem_limit * 4 // 5) // (2 * row_stream_bytes + row_acc_bytes)
    block_n = min(block_n, max_rows, _round_up(n, sublane))
    block_n = max(sublane, (block_n // sublane) * sublane)
    # TODO(synk): for extremely large class counts (C*itemsize*2*sublane > VMEM budget),
    # tile over C as well.

    n_tiles = pl.cdiv(n, block_n)
    num_splits = 2 if n_tiles >= 2 else 1     # dual-TensorCore split on v7x; free on 1-TC chips
    tiles_per_split = pl.cdiv(n_tiles, num_splits)
    total_tiles = num_splits * tiles_per_split
    needs_mask = (total_tiles * block_n != n)
    last_tile = n_tiles - 1

    def data_idx(c_id, i):
        # Clamp phantom tiles (when the split is uneven) onto the last real tile;
        # their rows are fully masked in the kernel so they contribute zero.
        t = jnp.minimum(c_id * tiles_per_split + i, last_tile)
        return (t, 0)

    kernel = functools.partial(
        _bbloss_ce_kernel,
        n_valid=n,
        block_n=block_n,
        tiles_per_split=tiles_per_split,
        needs_mask=needs_mask,
    )

    # TODO(synk): if logits tiles remain small (tiny C) and DMA is exposed, add
    # pipeline_mode=pl.Buffered(3) on the logits BlockSpec and sweep 2-4.
    grid_spec = pltpu.PrefetchScalarGridSpec(
        num_scalar_prefetch=0,
        grid=(num_splits, tiles_per_split),
        in_specs=[
            pl.BlockSpec((block_n, 1), data_idx),       # labels tile
            pl.BlockSpec((block_n, c), data_idx),       # logits tile
            pl.BlockSpec((block_n, kk), data_idx),      # preds tile
            pl.BlockSpec((block_n, kk), data_idx),      # tgts tile
        ],
        out_specs=[
            # Constant block index along the tile axis => resident accumulators;
            # each split (TensorCore) owns its own output slab.
            pl.BlockSpec((block_n, 1), lambda c_id, i: (c_id, 0)),
            pl.BlockSpec((block_n, kk), lambda c_id, i: (c_id, 0)),
        ],
    )

    ce_parts, mse_parts = pl.pallas_call(
        kernel,
        grid_spec=grid_spec,
        out_shape=(
            jax.ShapeDtypeStruct((num_splits * block_n, 1), jnp.float32),
            jax.ShapeDtypeStruct((num_splits * block_n, kk), jnp.float32),
        ),
        compiler_params=pltpu.CompilerParams(
            dimension_semantics=("parallel", "arbitrary"),
            vmem_limit_bytes=vmem_limit,
        ),
    )(labels, logits, preds_in, tgts)

    ce_mean = jnp.sum(ce_parts) / jnp.float32(n)
    if k > 0:
        mse_mean = jnp.sum(mse_parts) / jnp.float32(n * k)
    else:
        mse_mean = jnp.float32(0.0)
    return alphas[0] * ce_mean + alphas[1] * mse_mean


# -----------------------------------------------------------------------------
# Reference + self-test
# -----------------------------------------------------------------------------
def _reference(yp_logits, yp_reg, yt, alphas):
    labels = yt[:, 0].astype(jnp.int32)
    tgts = yt[:, 1:].astype(jnp.float32)
    logits = yp_logits.astype(jnp.float32)
    logp = jax.nn.log_softmax(logits, axis=-1)
    ce = -jnp.mean(jnp.take_along_axis(logp, labels[:, None], axis=-1))
    mse = jnp.mean((yp_reg.astype(jnp.float32) - tgts) ** 2)
    return alphas[0] * ce + alphas[1] * mse


if __name__ == "__main__":
    key = jax.random.PRNGKey(0)
    k1, k2, k3, k4 = jax.random.split(key, 4)

    N, C, K = 40, 32, 4          # batch, num classes, regression dim
    yp_logits = jax.random.normal(k1, (N, C), dtype=jnp.float32)
    yp_reg = jax.random.normal(k2, (N, K), dtype=jnp.float32)
    labels = jax.random.randint(k3, (N, 1), 0, C).astype(jnp.float32)
    reg_targets = jax.random.normal(k4, (N, K), dtype=jnp.float32)
    yt = jnp.concatenate([labels, reg_targets], axis=1)    # (N, 1+K)
    alphas = jnp.array([1.0, 0.5], dtype=jnp.float32)

    # 1) explicit small tile: multi-tile grid, dual-split, masked partial + phantom tile
    loss = bb_loss((yp_logits, yp_reg), yt, alphas, use_ce=True, block_n=16)
    loss = jax.block_until_ready(loss)
    ref = _reference(yp_logits, yp_reg, yt, alphas)
    assert jnp.allclose(loss, ref, rtol=1e-5, atol=1e-5), (loss, ref)

    # 2) default tile selection, native bf16 model outputs (no wrapper upcast, no pad)
    loss_bf16 = bb_loss(
        (yp_logits.astype(jnp.bfloat16), yp_reg.astype(jnp.bfloat16)), yt, alphas
    )
    loss_bf16 = jax.block_until_ready(loss_bf16)
    ref_bf16 = _reference(
        yp_logits.astype(jnp.bfloat16), yp_reg.astype(jnp.bfloat16), yt, alphas
    )
    assert jnp.allclose(loss_bf16, ref_bf16, rtol=5e-3, atol=5e-3), (loss_bf16, ref_bf16)

    # 3) use_ce=False branch: plain MSE(yp, yt), tiled
    mse_loss = bb_loss(yp_reg, reg_targets, alphas, use_ce=False)
    mse_loss = jax.block_until_ready(mse_loss)
    mse_ref = jnp.mean((yp_reg - reg_targets) ** 2)
    assert jnp.allclose(mse_loss, mse_ref, rtol=1e-5, atol=1e-5), (mse_loss, mse_ref)

    print("KERNEL_OK")
</pallas_src>

<mosaic_0001>
module attributes {stable_mosaic.version = 11 : i64} {
  func.func @_bbloss_ce_kernel(%arg0: i32, %arg1: i32, %arg2: memref<16x1xi32, #tpu.memory_space<vmem>>, %arg3: memref<16x32xf32, #tpu.memory_space<vmem>>, %arg4: memref<16x4xf32, #tpu.memory_space<vmem>>, %arg5: memref<16x4xf32, #tpu.memory_space<vmem>>, %arg6: memref<16x1xf32, #tpu.memory_space<vmem>>, %arg7: memref<16x4xf32, #tpu.memory_space<vmem>>) attributes {dimension_semantics = [#tpu.dimension_semantics<parallel>, #tpu.dimension_semantics<arbitrary>], iteration_bounds = array<i64: 2, 2>, scalar_prefetch = 0 : i64, scratch_operands = 0 : i64, tpu.core_type = #tpu.core_type<tc>, window_params = [{transform_indices = @transform_0, window_bounds = array<i64: 16, 1>}, {transform_indices = @transform_1, window_bounds = array<i64: 16, 32>}, {transform_indices = @transform_2, window_bounds = array<i64: 16, 4>}, {transform_indices = @transform_3, window_bounds = array<i64: 16, 4>}, {transform_indices = @transform_4, window_bounds = array<i64: 16, 1>}, {transform_indices = @transform_5, window_bounds = array<i64: 16, 4>}]} {
    %c0_i32 = arith.constant 0 : i32
    %0 = arith.cmpi eq, %arg1, %c0_i32 : i32
    %1 = arith.extui %0 : i1 to i32
    %c0_i32_0 = arith.constant 0 : i32
    %2 = arith.cmpi ne, %1, %c0_i32_0 : i32
    scf.if %2 {
      %cst_21 = arith.constant 0.000000e+00 : f32
      %45 = vector.broadcast %cst_21 : f32 to vector<16x1xf32>
      %c0_22 = arith.constant 0 : index
      %c0_23 = arith.constant 0 : index
      %46 = vector.load %arg6[%c0_22, %c0_23] : memref<16x1xf32, #tpu.memory_space<vmem>>, vector<16x1xf32>
      tpu.vector_store %arg6[%c0_22, %c0_23], %45 {strides = array<i32>} : memref<16x1xf32, #tpu.memory_space<vmem>>, vector<16x1xf32>,
      %cst_24 = arith.constant 0.000000e+00 : f32
      %47 = vector.broadcast %cst_24 : f32 to vector<16x4xf32>
      %c0_25 = arith.constant 0 : index
      %c0_26 = arith.constant 0 : index
      %48 = vector.load %arg7[%c0_25, %c0_26] : memref<16x4xf32, #tpu.memory_space<vmem>>, vector<16x4xf32>
      tpu.vector_store %arg7[%c0_25, %c0_26], %47 {strides = array<i32>} : memref<16x4xf32, #tpu.memory_space<vmem>>, vector<16x4xf32>,
    } else {
    }
    %c0 = arith.constant 0 : index
    %c0_1 = arith.constant 0 : index
    %3 = vector.load %arg3[%c0, %c0_1] : memref<16x32xf32, #tpu.memory_space<vmem>>, vector<16x32xf32>
    %c0_2 = arith.constant 0 : index
    %c0_3 = arith.constant 0 : index
    %4 = vector.load %arg2[%c0_2, %c0_3] : memref<16x1xi32, #tpu.memory_space<vmem>>, vector<16x1xi32>
    %cst = arith.constant dense<0xFF800000> : vector<16xf32>
    %5 = vector.multi_reduction <maximumf>, %3, %cst [1] : vector<16x32xf32> to vector<16xf32>
    %6 = vector.shape_cast %5 : vector<16xf32> to vector<16x1xf32>
    %7 = vector.broadcast %6 : vector<16x1xf32> to vector<16x32xf32>
    %8 = arith.subf %3, %7 : vector<16x32xf32>
    %9 = math.exp %8 : vector<16x32xf32>
    %cst_4 = arith.constant dense<0.000000e+00> : vector<16xf32>
    %10 = vector.multi_reduction <add>, %9, %cst_4 [1] : vector<16x32xf32> to vector<16xf32>
    %11 = vector.shape_cast %10 : vector<16xf32> to vector<16x1xf32>
    %12 = math.log %11 : vector<16x1xf32>
    %13 = tpu.iota {dimensions = array<i32: 1>} : vector<16x32xi32>
    %14 = vector.broadcast %4 : vector<16x1xi32> to vector<16x32xi32>
    %15 = arith.cmpi eq, %13, %14 : vector<16x32xi32>
    %cst_5 = arith.constant 0.000000e+00 : f32
    %16 = vector.broadcast %cst_5 : f32 to vector<16x32xf32>
    %17 = arith.select %15, %8, %16 : vector<16x32xi1>, vector<16x32xf32>
    %cst_6 = arith.constant dense<0.000000e+00> : vector<16xf32>
    %18 = vector.multi_reduction <add>, %17, %cst_6 [1] : vector<16x32xf32> to vector<16xf32>
    %19 = vector.shape_cast %18 : vector<16xf32> to vector<16x1xf32>
    %20 = arith.subf %12, %19 : vector<16x1xf32>
    %c0_7 = arith.constant 0 : index
    %c0_8 = arith.constant 0 : index
    %21 = vector.load %arg4[%c0_7, %c0_8] : memref<16x4xf32, #tpu.memory_space<vmem>>, vector<16x4xf32>
    %c0_9 = arith.constant 0 : index
    %c0_10 = arith.constant 0 : index
    %22 = vector.load %arg5[%c0_9, %c0_10] : memref<16x4xf32, #tpu.memory_space<vmem>>, vector<16x4xf32>
    %23 = arith.subf %21, %22 : vector<16x4xf32>
    %24 = arith.mulf %23, %23 : vector<16x4xf32>
    %c2_i32 = arith.constant 2 : i32
    %25 = arith.muli %arg0, %c2_i32 : i32
    %26 = arith.addi %25, %arg1 : i32
    %c16_i32 = arith.constant 16 : i32
    %27 = arith.muli %26, %c16_i32 : i32
    %28 = tpu.iota {dimensions = array<i32: 0>} : vector<16x1xi32>
    %29 = vector.broadcast %27 : i32 to vector<16x1xi32>
    %30 = arith.addi %29, %28 : vector<16x1xi32>
    %c40_i32 = arith.constant 40 : i32
    %31 = vector.broadcast %c40_i32 : i32 to vector<16x1xi32>
    %32 = arith.cmpi slt, %30, %31 : vector<16x1xi32>
    %cst_11 = arith.constant 0.000000e+00 : f32
    %33 = vector.broadcast %cst_11 : f32 to vector<16x1xf32>
    %34 = arith.select %32, %20, %33 : vector<16x1xi1>, vector<16x1xf32>
    %cst_12 = arith.constant 0.000000e+00 : f32
    %35 = vector.shape_cast %32 : vector<16x1xi1> to vector<16x1xi1>
    %36 = vector.broadcast %35 : vector<16x1xi1> to vector<16x4xi1>
    %37 = vector.broadcast %cst_12 : f32 to vector<16x4xf32>
    %38 = arith.select %36, %24, %37 : vector<16x4xi1>, vector<16x4xf32>
    %c0_13 = arith.constant 0 : index
    %c0_14 = arith.constant 0 : index
    %39 = vector.load %arg6[%c0_13, %c0_14] : memref<16x1xf32, #tpu.memory_space<vmem>>, vector<16x1xf32>
    %40 = arith.addf %39, %34 : vector<16x1xf32>
    %c0_15 = arith.constant 0 : index
    %c0_16 = arith.constant 0 : index
    %41 = vector.load %arg6[%c0_15, %c0_16] : memref<16x1xf32, #tpu.memory_space<vmem>>, vector<16x1xf32>
    tpu.vector_store %arg6[%c0_15, %c0_16], %40 {strides = array<i32>} : memref<16x1xf32, #tpu.memory_space<vmem>>, vector<16x1xf32>,
    %c0_17 = arith.constant 0 : index
    %c0_18 = arith.constant 0 : index
    %42 = vector.load %arg7[%c0_17, %c0_18] : memref<16x4xf32, #tpu.memory_space<vmem>>, vector<16x4xf32>
    %43 = arith.addf %42, %38 : vector<16x4xf32>
    %c0_19 = arith.constant 0 : index
    %c0_20 = arith.constant 0 : index
    %44 = vector.load %arg7[%c0_19, %c0_20] : memref<16x4xf32, #tpu.memory_space<vmem>>, vector<16x4xf32>
    tpu.vector_store %arg7[%c0_19, %c0_20], %43 {strides = array<i32>} : memref<16x4xf32, #tpu.memory_space<vmem>>, vector<16x4xf32>,
    return
  }
  func.func @transform_0(%arg0: i32, %arg1: i32) -> (i32, i32) {
    %c2_i32 = arith.constant 2 : i32
    %0 = arith.muli %arg0, %c2_i32 : i32
    %1 = arith.addi %0, %arg1 : i32
    %c2_i32_0 = arith.constant 2 : i32
    %2 = arith.minsi %1, %c2_i32_0 : i32
    %c0_i32 = arith.constant 0 : i32
    %c0_i32_1 = arith.constant 0 : i32
    return %2, %c0_i32 : i32, i32
  }
  func.func @transform_1(%arg0: i32, %arg1: i32) -> (i32, i32) {
    %c2_i32 = arith.constant 2 : i32
    %0 = arith.muli %arg0, %c2_i32 : i32
    %1 = arith.addi %0, %arg1 : i32
    %c2_i32_0 = arith.constant 2 : i32
    %2 = arith.minsi %1, %c2_i32_0 : i32
    %c0_i32 = arith.constant 0 : i32
    %c0_i32_1 = arith.constant 0 : i32
    return %2, %c0_i32 : i32, i32
  }
  func.func @transform_2(%arg0: i32, %arg1: i32) -> (i32, i32) {
    %c2_i32 = arith.constant 2 : i32
    %0 = arith.muli %arg0, %c2_i32 : i32
    %1 = arith.addi %0, %arg1 : i32
    %c2_i32_0 = arith.constant 2 : i32
    %2 = arith.minsi %1, %c2_i32_0 : i32
    %c0_i32 = arith.constant 0 : i32
    %c0_i32_1 = arith.constant 0 : i32
    return %2, %c0_i32 : i32, i32
  }
  func.func @transform_3(%arg0: i32, %arg1: i32) -> (i32, i32) {
    %c2_i32 = arith.constant 2 : i32
    %0 = arith.muli %arg0, %c2_i32 : i32
    %1 = arith.addi %0, %arg1 : i32
    %c2_i32_0 = arith.constant 2 : i32
    %2 = arith.minsi %1, %c2_i32_0 : i32
    %c0_i32 = arith.constant 0 : i32
    %c0_i32_1 = arith.constant 0 : i32
    return %2, %c0_i32 : i32, i32
  }
  func.func @transform_4(%arg0: i32, %arg1: i32) -> (i32, i32) {
    %c0_i32 = arith.constant 0 : i32
    %c0_i32_0 = arith.constant 0 : i32
    return %arg0, %c0_i32 : i32, i32
  }
  func.func @transform_5(%arg0: i32, %arg1: i32) -> (i32, i32) {
    %c0_i32 = arith.constant 0 : i32
    %c0_i32_0 = arith.constant 0 : i32
    return %arg0, %c0_i32 : i32, i32
  }
}

</mosaic_0001>

<llo_original>
// kernel: tpu_custom_call.1
$region0: #{tpu_custom_call.1}
  #allocation0 [shape = 'u32[]', space=smem, size = 0x4, offset = 0x4, fixed_abs, tag = 'smem constant byte address 0x4 - core index']
  #allocation1 [shape = 'u32[144,128]{1,0:T(1,128)}', space=vmem, size = 0x12000, scoped, tag = 'internal scratch']
  %s0 = inlined_call_operand.vmem [shape: s32[40,1], index: 0, kind: input, shape index: {}]
  %s1 = inlined_call_operand.vmem [shape: f32[40,32], index: 1, kind: input, shape index: {}]
  %s2 = inlined_call_operand.vmem [shape: f32[40,4], index: 2, kind: input, shape index: {}]
  %s3 = inlined_call_operand.vmem [shape: f32[40,4], index: 3, kind: input, shape index: {}]
  %s4 = inlined_call_operand.vmem [shape: f32[32,1], index: 4, kind: output, shape index: {0}]
  %s5 = inlined_call_operand.vmem [shape: f32[32,4], index: 5, kind: output, shape index: {1}]
  %6 = xla_tuple %s4, %s5
  %s7 = sld [smem:[#allocation0]]
  $region61: #{tpu_custom_call.1} parent=0
    _
  %s9 = ssub.s32 1, %s7
  %s10 = scalar_select 0, %s9, %s7
  loop: start=0, step=1, limit=6
  $region2: #{tpu_custom_call.1} parent=0 // loop_pre_header
    _
  $region3: #{tpu_custom_call.1} parent=0 // loop_header
    %s12 = sphi 0, %s16
    %p13 = scmp.ge.s32.totalorder %s12, 6
    %s19 = sphi 0, %s31
    %s20 = sphi 0, %s27
    %s21 = sphi 0, %s19
    %s22 = sphi 0, %s20
    %s23 = sphi 0, %s21
    %s24 = sphi 0, %s22
    %s42 = sphi 0, %s44
    %s45 = sphi 0, %s42
    %s46 = sphi 0, %s45
    %s62 = sphi 0, %s46
    %s76 = sphi 0, %s78
    %s79 = sphi 0, %s76
    %s80 = sphi 0, %s79
    %s96 = sphi 0, %s80
    %s110 = sphi 0, %s112
    %s113 = sphi 0, %s110
    %s114 = sphi 0, %s113
    %s130 = sphi 0, %s114
    %s144 = sphi 0, %s146
    %s147 = sphi 0, %s144
    %s148 = sphi 0, %s147
    %s164 = sphi 0, %s148
    %s170 = sphi 0, %s172
    %s173 = sphi 0, %s170
    %s174 = sphi 0, %s173
    %s190 = sphi 0, %s174
    %s196 = sphi 0, %s198
    %s199 = sphi 0, %s196
    %s200 = sphi 0, %s199
    %s216 = sphi 0, %s200
  $region4: #{tpu_custom_call.1} parent=0 // loop_header_branch
    %15 = sbr.rel (%p13) target = $region8
  $region5: #{tpu_custom_call.1} parent=0 // loop_body
    %s17 = ssub.s32 %s12, 1
    %s18 = ssub.s32 %s12, 2
    %s25 = sadd.s32 1, %s20
    %p26 = scmp.ge.s32.totalorder %s25, 2
    %s27 = scalar_select %p26, 0, %s25
    %s28 = sadd.s32 1, %s19
    %s29 = scalar_select %p26, %s28, %s19
    %p30 = scmp.ge.s32.totalorder %s29, 2
    %s31 = scalar_select %p30, 0, %s29
    %s32 = smul.u32 %s19, 2
    %s33 = sadd.s32 %s32, %s20
    %p34 = scmp.lt.s32.totalorder %s33, 2
    %s35 = scalar_select %p34, %s33, 2
    %s36 = smul.u32 %s31, 2
    %s37 = sadd.s32 %s36, %s27
    %p38 = scmp.lt.s32.totalorder %s37, 2
    %s39 = scalar_select %p38, %s37, 2
    %s40 = ssub.s32 %s35, %s39
    %p41 = scmp.eq.s32.totalorder %s40, 0
    %s43 = sadd.s32 %s42, 1
    %s44 = scalar_select %p41, %s42, %s43
    %p47 = pneg %p41
    %p48 = scmp.eq.s32.totalorder %s12, 3
    %p49 = por %p47, %p48
    %p50 = scmp.ne.s32.totalorder %s42, %s45
    %p51 = scmp.eq.s32.totalorder %s12, 0
    %p52 = por %p50, %p51
    %p53 = scmp.ne.s32.totalorder %s42, %s45
    %p54 = scmp.eq.s32.totalorder %s17, 3
    %p55 = por %p53, %p54
    %p56 = scmp.ne.s32.totalorder %s45, %s46
    %p57 = scmp.eq.s32.totalorder %s17, 0
    %p58 = por %p56, %p57
    %p59 = scmp.ne.s32.totalorder %s45, %s46
    %p60 = scmp.eq.s32.totalorder %s18, 3
    %p61 = por %p59, %p60
    %p63 = scmp.ne.s32.totalorder %s46, %s62
    %p64 = scmp.eq.s32.totalorder %s18, 0
    %p65 = por %p63, %p64
    %s66 = smul.u32 %s19, 2
    %s67 = sadd.s32 %s66, %s20
    %p68 = scmp.lt.s32.totalorder %s67, 2
    %s69 = scalar_select %p68, %s67, 2
    %s70 = smul.u32 %s31, 2
    %s71 = sadd.s32 %s70, %s27
    %p72 = scmp.lt.s32.totalorder %s71, 2
    %s73 = scalar_select %p72, %s71, 2
    %s74 = ssub.s32 %s69, %s73
    %p75 = scmp.eq.s32.totalorder %s74, 0
    %s77 = sadd.s32 %s76, 1
    %s78 = scalar_select %p75, %s76, %s77
    %p81 = pneg %p75
    %p82 = scmp.eq.s32.totalorder %s12, 3
    %p83 = por %p81, %p82
    %p84 = scmp.ne.s32.totalorder %s76, %s79
    %p85 = scmp.eq.s32.totalorder %s12, 0
    %p86 = por %p84, %p85
    %p87 = scmp.ne.s32.totalorder %s76, %s79
    %p88 = scmp.eq.s32.totalorder %s17, 3
    %p89 = por %p87, %p88
    %p90 = scmp.ne.s32.totalorder %s79, %s80
    %p91 = scmp.eq.s32.totalorder %s17, 0
    %p92 = por %p90, %p91
    %p93 = scmp.ne.s32.totalorder %s79, %s80
    %p94 = scmp.eq.s32.totalorder %s18, 3
    %p95 = por %p93, %p94
    %p97 = scmp.ne.s32.totalorder %s80, %s96
    %p98 = scmp.eq.s32.totalorder %s18, 0
    %p99 = por %p97, %p98
    %s100 = smul.u32 %s19, 2
    %s101 = sadd.s32 %s100, %s20
    %p102 = scmp.lt.s32.totalorder %s101, 2
    %s103 = scalar_select %p102, %s101, 2
    %s104 = smul.u32 %s31, 2
    %s105 = sadd.s32 %s104, %s27
    %p106 = scmp.lt.s32.totalorder %s105, 2
    %s107 = scalar_select %p106, %s105, 2
    %s108 = ssub.s32 %s103, %s107
    %p109 = scmp.eq.s32.totalorder %s108, 0
    %s111 = sadd.s32 %s110, 1
    %s112 = scalar_select %p109, %s110, %s111
    %p115 = pneg %p109
    %p116 = scmp.eq.s32.totalorder %s12, 3
    %p117 = por %p115, %p116
    %p118 = scmp.ne.s32.totalorder %s110, %s113
    %p119 = scmp.eq.s32.totalorder %s12, 0
    %p120 = por %p118, %p119
    %p121 = scmp.ne.s32.totalorder %s110, %s113
    %p122 = scmp.eq.s32.totalorder %s17, 3
    %p123 = por %p121, %p122
    %p124 = scmp.ne.s32.totalorder %s113, %s114
    %p125 = scmp.eq.s32.totalorder %s17, 0
    %p126 = por %p124, %p125
    %p127 = scmp.ne.s32.totalorder %s113, %s114
    %p128 = scmp.eq.s32.totalorder %s18, 3
    %p129 = por %p127, %p128
    %p131 = scmp.ne.s32.totalorder %s114, %s130
    %p132 = scmp.eq.s32.totalorder %s18, 0
    %p133 = por %p131, %p132
    %s134 = smul.u32 %s19, 2
    %s135 = sadd.s32 %s134, %s20
    %p136 = scmp.lt.s32.totalorder %s135, 2
    %s137 = scalar_select %p136, %s135, 2
    %s138 = smul.u32 %s31, 2
    %s139 = sadd.s32 %s138, %s27
    %p140 = scmp.lt.s32.totalorder %s139, 2
    %s141 = scalar_select %p140, %s139, 2
    %s142 = ssub.s32 %s137, %s141
    %p143 = scmp.eq.s32.totalorder %s142, 0
    %s145 = sadd.s32 %s144, 1
    %s146 = scalar_select %p143, %s144, %s145
    %p149 = pneg %p143
    %p150 = scmp.eq.s32.totalorder %s12, 3
    %p151 = por %p149, %p150
    %p152 = scmp.ne.s32.totalorder %s144, %s147
    %p153 = scmp.eq.s32.totalorder %s12, 0
    %p154 = por %p152, %p153
    %p155 = scmp.ne.s32.totalorder %s144, %s147
    %p156 = scmp.eq.s32.totalorder %s17, 3
    %p157 = por %p155, %p156
    %p158 = scmp.ne.s32.totalorder %s147, %s148
    %p159 = scmp.eq.s32.totalorder %s17, 0
    %p160 = por %p158, %p159
    %p161 = scmp.ne.s32.totalorder %s147, %s148
    %p162 = scmp.eq.s32.totalorder %s18, 3
    %p163 = por %p161, %p162
    %p165 = scmp.ne.s32.totalorder %s148, %s164
    %p166 = scmp.eq.s32.totalorder %s18, 0
    %p167 = por %p165, %p166
    %s168 = ssub.s32 %s19, %s31
    %p169 = scmp.eq.s32.totalorder %s168, 0
    %s171 = sadd.s32 %s170, 1
    %s172 = scalar_select %p169, %s170, %s171
    %p175 = pneg %p169
    %p176 = scmp.eq.s32.totalorder %s12, 3
    %p177 = por %p175, %p176
    %p178 = scmp.ne.s32.totalorder %s170, %s173
    %p179 = scmp.eq.s32.totalorder %s12, 0
    %p180 = por %p178, %p179
    %p181 = scmp.ne.s32.totalorder %s170, %s173
    %p182 = scmp.eq.s32.totalorder %s17, 3
    %p183 = por %p181, %p182
    %p184 = scmp.ne.s32.totalorder %s173, %s174
    %p185 = scmp.eq.s32.totalorder %s17, 0
    %p186 = por %p184, %p185
    %p187 = scmp.ne.s32.totalorder %s173, %s174
    %p188 = scmp.eq.s32.totalorder %s18, 3
    %p189 = por %p187, %p188
    %p191 = scmp.ne.s32.totalorder %s174, %s190
    %p192 = scmp.eq.s32.totalorder %s18, 0
    %p193 = por %p191, %p192
    %s194 = ssub.s32 %s19, %s31
    %p195 = scmp.eq.s32.totalorder %s194, 0
    %s197 = sadd.s32 %s196, 1
    %s198 = scalar_select %p195, %s196, %s197
    %p201 = pneg %p195
    %p202 = scmp.eq.s32.totalorder %s12, 3
    %p203 = por %p201, %p202
    %p204 = scmp.ne.s32.totalorder %s196, %s199
    %p205 = scmp.eq.s32.totalorder %s12, 0
    %p206 = por %p204, %p205
    %p207 = scmp.ne.s32.totalorder %s196, %s199
    %p208 = scmp.eq.s32.totalorder %s17, 3
    %p209 = por %p207, %p208
    %p210 = scmp.ne.s32.totalorder %s199, %s200
    %p211 = scmp.eq.s32.totalorder %s17, 0
    %p212 = por %p210, %p211
    %p213 = scmp.ne.s32.totalorder %s199, %s200
    %p214 = scmp.eq.s32.totalorder %s18, 3
    %p215 = por %p213, %p214
    %p217 = scmp.ne.s32.totalorder %s200, %s216
    %p218 = scmp.eq.s32.totalorder %s18, 0
    %p219 = por %p217, %p218
    %p220 = scmp.le.s32.totalorder 1, %s12
    %p221 = scmp.lt.s32.totalorder %s12, 5
    %p222 = pnand %p220, %p221
    %p223 = pneg %p222
    // Predicated region
    $region9: #{tpu_custom_call.1} parent=5 // pred_check
      _
    $region10: #{tpu_custom_call.1} parent=5 // pred_check_branch
      %225 = sbr.rel (%p222) target = $region12
    $region11: #{tpu_custom_call.1} parent=5 // pred_region
      %s226 = ssub.s32 %s12, 1
    $region12: #{tpu_custom_call.1} parent=5 // pred_fallthru
      _
    %p227 = scmp.lt.s32.totalorder %s12, 4
    // Predicated region
    $region13: #{tpu_custom_call.1} parent=5 // pred_check
      %p228 = pneg %p227
    $region14: #{tpu_custom_call.1} parent=5 // pred_check_branch
      %230 = sbr.rel (%p228) target = $region16
    $region15: #{tpu_custom_call.1} parent=5 // pred_region
      // Predicated region
      $region17: #{tpu_custom_call.1} parent=15 // pred_check
        %p231 = pneg %p52
      $region18: #{tpu_custom_call.1} parent=15 // pred_check_branch
        %233 = sbr.rel (%p231) target = $region20
      $region19: #{tpu_custom_call.1} parent=15 // pred_region
        %s234 = smul.u32 %s19, 2
        %s235 = sadd.s32 %s234, %s20
        %p236 = scmp.lt.s32.totalorder %s235, 2
        %s237 = scalar_select %p236, %s235, 2
        %s238 = smul.u32 2, %s237
        %s239 = ssub.s32 5, %s238
        %p240 = scmp.lt.s32.totalorder %s239, 2
        %s241 = scalar_select %p240, %s239, 2
        %s242 = smul.u32 128, %s241
        %p243 = scmp.lt.s32.totalorder %s238, 4
        %s244 = scalar_select %p243, %s238, 4
        %s245 = smul.addr %s244, 8
        %s246 = scalar_lea.vmem %s0, %s245
        %s247 = smul.u32 %s19, 2
        %s248 = sadd.s32 %s247, %s20
        %p249 = scmp.lt.s32.totalorder %s248, 2
        %s250 = scalar_select %p249, %s248, 2
        %s251 = smul.u32 2, %s250
        %s252 = ssub.s32 5, %s251
        %p253 = scmp.lt.s32.totalorder %s252, 2
        %s254 = scalar_select %p253, %s252, 2
        %s255 = smul.u32 128, %s254
      $region20: #{tpu_custom_call.1} parent=15 // pred_fallthru
        _
      // Predicated region
      $region21: #{tpu_custom_call.1} parent=15 // pred_check
        %p256 = pneg %p86
      $region22: #{tpu_custom_call.1} parent=15 // pred_check_branch
        %258 = sbr.rel (%p256) target = $region24
      $region23: #{tpu_custom_call.1} parent=15 // pred_region
        %s259 = smul.u32 %s19, 2
        %s260 = sadd.s32 %s259, %s20
        %p261 = scmp.lt.s32.totalorder %s260, 2
        %s262 = scalar_select %p261, %s260, 2
        %s263 = smul.u32 2, %s262
        %s264 = ssub.s32 5, %s263
        %p265 = scmp.lt.s32.totalorder %s264, 2
        %s266 = scalar_select %p265, %s264, 2
        %s267 = smul.u32 128, %s266
        %p268 = scmp.lt.s32.totalorder %s263, 4
        %s269 = scalar_select %p268, %s263, 4
        %s270 = smul.addr %s269, 8
        %s271 = scalar_lea.vmem %s1, %s270
        %s272 = smul.u32 %s19, 2
        %s273 = sadd.s32 %s272, %s20
        %p274 = scmp.lt.s32.totalorder %s273, 2
        %s275 = scalar_select %p274, %s273, 2
        %s276 = smul.u32 2, %s275
        %s277 = ssub.s32 5, %s276
        %p278 = scmp.lt.s32.totalorder %s277, 2
        %s279 = scalar_select %p278, %s277, 2
        %s280 = smul.u32 128, %s279
      $region24: #{tpu_custom_call.1} parent=15 // pred_fallthru
        _
      // Predicated region
      $region25: #{tpu_custom_call.1} parent=15 // pred_check
        %p281 = pneg %p120
      $region26: #{tpu_custom_call.1} parent=15 // pred_check_branch
        %283 = sbr.rel (%p281) target = $region28
      $region27: #{tpu_custom_call.1} parent=15 // pred_region
        %s284 = smul.u32 %s19, 2
        %s285 = sadd.s32 %s284, %s20
        %p286 = scmp.lt.s32.totalorder %s285, 2
        %s287 = scalar_select %p286, %s285, 2
        %s288 = smul.u32 2, %s287
        %s289 = ssub.s32 5, %s288
        %p290 = scmp.lt.s32.totalorder %s289, 2
        %s291 = scalar_select %p290, %s289, 2
        %s292 = smul.u32 128, %s291
        %p293 = scmp.lt.s32.totalorder %s288, 4
        %s294 = scalar_select %p293, %s288, 4
        %s295 = smul.addr %s294, 8
        %s296 = scalar_lea.vmem %s2, %s295
        %s297 = smul.u32 %s19, 2
        %s298 = sadd.s32 %s297, %s20
        %p299 = scmp.lt.s32.totalorder %s298, 2
        %s300 = scalar_select %p299, %s298, 2
        %s301 = smul.u32 2, %s300
        %s302 = ssub.s32 5, %s301
        %p303 = scmp.lt.s32.totalorder %s302, 2
        %s304 = scalar_select %p303, %s302, 2
        %s305 = smul.u32 128, %s304
      $region28: #{tpu_custom_call.1} parent=15 // pred_fallthru
        _
      // Predicated region
      $region29: #{tpu_custom_call.1} parent=15 // pred_check
        %p306 = pneg %p154
      $region30: #{tpu_custom_call.1} parent=15 // pred_check_branch
        %308 = sbr.rel (%p306) target = $region32
      $region31: #{tpu_custom_call.1} parent=15 // pred_region
        %s309 = smul.u32 %s19, 2
        %s310 = sadd.s32 %s309, %s20
        %p311 = scmp.lt.s32.totalorder %s310, 2
        %s312 = scalar_select %p311, %s310, 2
        %s313 = smul.u32 2, %s312
        %s314 = ssub.s32 5, %s313
        %p315 = scmp.lt.s32.totalorder %s314, 2
        %s316 = scalar_select %p315, %s314, 2
        %s317 = smul.u32 128, %s316
        %p318 = scmp.lt.s32.totalorder %s313, 4
        %s319 = scalar_select %p318, %s313, 4
        %s320 = smul.addr %s319, 8
        %s321 = scalar_lea.vmem %s3, %s320
        %s322 = smul.u32 %s19, 2
        %s323 = sadd.s32 %s322, %s20
        %p324 = scmp.lt.s32.totalorder %s323, 2
        %s325 = scalar_select %p324, %s323, 2
        %s326 = smul.u32 2, %s325
        %s327 = ssub.s32 5, %s326
        %p328 = scmp.lt.s32.totalorder %s327, 2
        %s329 = scalar_select %p328, %s327, 2
        %s330 = smul.u32 128, %s329
      $region32: #{tpu_custom_call.1} parent=15 // pred_fallthru
        _
    $region16: #{tpu_custom_call.1} parent=5 // pred_fallthru
      _
    %p331 = scmp.le.s32.totalorder 1, %s12
    %p332 = scmp.lt.s32.totalorder %s12, 5
    %p333 = pnand %p331, %p332
    %p334 = pneg %p333
    // Predicated region
    $region33: #{tpu_custom_call.1} parent=5 // pred_check
      _
    $region34: #{tpu_custom_call.1} parent=5 // pred_check_branch
      %336 = sbr.rel (%p333) target = $region36
    $region35: #{tpu_custom_call.1} parent=5 // pred_region
      %s337 = ssub.s32 %s12, 1
      %s338 = smul.u32 %s21, 2
      %s339 = sadd.s32 %s338, %s22
      %p340 = scmp.lt.s32.totalorder %s339, 2
      %s341 = scalar_select %p340, %s339, 2
      %s342 = smul.u32 2, %s341
      %s343 = ssub.s32 5, %s342
      %p344 = scmp.lt.s32.totalorder %s343, 2
      %s345 = scalar_select %p344, %s343, 2
      %s346 = smul.u32 128, %s345
      %p347 = scmp.lt.s32.totalorder %s342, 4
      %s348 = scalar_select %p347, %s342, 4
      %s349 = smul.addr %s348, 8
      %s350 = scalar_lea.vmem %s0, %s349
      %p351 = pneg %p58
      %p352 = pneg %p55
      %s353 = smul.u32 %s21, 2
      %s354 = sadd.s32 %s353, %s22
      %p355 = scmp.lt.s32.totalorder %s354, 2
      %s356 = scalar_select %p355, %s354, 2
      %s357 = smul.u32 2, %s356
      %s358 = ssub.s32 5, %s357
      %p359 = scmp.lt.s32.totalorder %s358, 2
      %s360 = scalar_select %p359, %s358, 2
      %s361 = smul.u32 128, %s360
      %p362 = scmp.lt.s32.totalorder %s357, 4
      %s363 = scalar_select %p362, %s357, 4
      %s364 = smul.addr %s363, 8
      %s365 = scalar_lea.vmem %s1, %s364
      %p366 = pneg %p92
      %p367 = pneg %p89
      %s368 = smul.u32 %s21, 2
      %s369 = sadd.s32 %s368, %s22
      %p370 = scmp.lt.s32.totalorder %s369, 2
      %s371 = scalar_select %p370, %s369, 2
      %s372 = smul.u32 2, %s371
      %s373 = ssub.s32 5, %s372
      %p374 = scmp.lt.s32.totalorder %s373, 2
      %s375 = scalar_select %p374, %s373, 2
      %s376 = smul.u32 128, %s375
      %p377 = scmp.lt.s32.totalorder %s372, 4
      %s378 = scalar_select %p377, %s372, 4
      %s379 = smul.addr %s378, 8
      %s380 = scalar_lea.vmem %s2, %s379
      %p381 = pneg %p126
      %p382 = pneg %p123
      %s383 = smul.u32 %s21, 2
      %s384 = sadd.s32 %s383, %s22
      %p385 = scmp.lt.s32.totalorder %s384, 2
      %s386 = scalar_select %p385, %s384, 2
      %s387 = smul.u32 2, %s386
      %s388 = ssub.s32 5, %s387
      %p389 = scmp.lt.s32.totalorder %s388, 2
      %s390 = scalar_select %p389, %s388, 2
      %s391 = smul.u32 128, %s390
      %p392 = scmp.lt.s32.totalorder %s387, 4
      %s393 = scalar_select %p392, %s387, 4
      %s394 = smul.addr %s393, 8
      %s395 = scalar_lea.vmem %s3, %s394
      %p396 = pneg %p160
      %p397 = pneg %p157
      %p398 = pneg %p186
      %p399 = pneg %p183
      %s400 = smul.u32 2, %s21
      %p401 = scmp.lt.s32.totalorder %s400, 3
      %s402 = scalar_select %p401, %s400, 3
      %s403 = smul.addr %s402, 8
      %s404 = scalar_lea.vmem %s4, %s403
      %p405 = pneg %p212
      %p406 = pneg %p209
      %s407 = smul.u32 2, %s21
      %p408 = scmp.lt.s32.totalorder %s407, 3
      %s409 = scalar_select %p408, %s407, 3
      %s410 = smul.addr %s409, 8
      %s411 = scalar_lea.vmem %s5, %s410
      %s412 = smul.u32 %s21, 2
      %s413 = sadd.s32 %s412, %s22
      %p414 = scmp.lt.s32.totalorder %s413, 2
      %s415 = scalar_select %p414, %s413, 2
      %s416 = smul.u32 2, %s415
      %s417 = ssub.s32 5, %s416
      %p418 = scmp.lt.s32.totalorder %s417, 2
      %s419 = scalar_select %p418, %s417, 2
      %s420 = smul.u32 128, %s419
      %p421 = scmp.lt.s32.totalorder %s416, 4
      %s422 = scalar_select %p421, %s416, 4
      %s423 = smul.addr %s422, 8
      %s424 = scalar_lea.vmem %s0, %s423
      %s425 = smul.u32 %s21, 2
      %s426 = sadd.s32 %s425, %s22
      %p427 = scmp.lt.s32.totalorder %s426, 2
      %s428 = scalar_select %p427, %s426, 2
      %s429 = smul.u32 2, %s428
      %s430 = ssub.s32 5, %s429
      %p431 = scmp.lt.s32.totalorder %s430, 2
      %s432 = scalar_select %p431, %s430, 2
      %s433 = smul.u32 128, %s432
      %s434 = smul.u32 %s21, 2
      %s435 = sadd.s32 %s434, %s22
      %p436 = scmp.lt.s32.totalorder %s435, 2
      %s437 = scalar_select %p436, %s435, 2
      %s438 = smul.u32 2, %s437
      %s439 = ssub.s32 5, %s438
      %p440 = scmp.lt.s32.totalorder %s439, 2
      %s441 = scalar_select %p440, %s439, 2
      %s442 = smul.u32 128, %s441
      %p443 = scmp.lt.s32.totalorder %s438, 4
      %s444 = scalar_select %p443, %s438, 4
      %s445 = smul.addr %s444, 8
      %s446 = scalar_lea.vmem %s1, %s445
      %s447 = smul.u32 %s21, 2
      %s448 = sadd.s32 %s447, %s22
      %p449 = scmp.lt.s32.totalorder %s448, 2
      %s450 = scalar_select %p449, %s448, 2
      %s451 = smul.u32 2, %s450
      %s452 = ssub.s32 5, %s451
      %p453 = scmp.lt.s32.totalorder %s452, 2
      %s454 = scalar_select %p453, %s452, 2
      %s455 = smul.u32 128, %s454
      %s456 = smul.u32 %s21, 2
      %s457 = sadd.s32 %s456, %s22
      %p458 = scmp.lt.s32.totalorder %s457, 2
      %s459 = scalar_select %p458, %s457, 2
      %s460 = smul.u32 2, %s459
      %s461 = ssub.s32 5, %s460
      %p462 = scmp.lt.s32.totalorder %s461, 2
      %s463 = scalar_select %p462, %s461, 2
      %s464 = smul.u32 128, %s463
      %p465 = scmp.lt.s32.totalorder %s460, 4
      %s466 = scalar_select %p465, %s460, 4
      %s467 = smul.addr %s466, 8
      %s468 = scalar_lea.vmem %s2, %s467
      %s469 = smul.u32 %s21, 2
      %s470 = sadd.s32 %s469, %s22
      %p471 = scmp.lt.s32.totalorder %s470, 2
      %s472 = scalar_select %p471, %s470, 2
      %s473 = smul.u32 2, %s472
      %s474 = ssub.s32 5, %s473
      %p475 = scmp.lt.s32.totalorder %s474, 2
      %s476 = scalar_select %p475, %s474, 2
      %s477 = smul.u32 128, %s476
      %s478 = smul.u32 %s21, 2
      %s479 = sadd.s32 %s478, %s22
      %p480 = scmp.lt.s32.totalorder %s479, 2
      %s481 = scalar_select %p480, %s479, 2
      %s482 = smul.u32 2, %s481
      %s483 = ssub.s32 5, %s482
      %p484 = scmp.lt.s32.totalorder %s483, 2
      %s485 = scalar_select %p484, %s483, 2
      %s486 = smul.u32 128, %s485
      %p487 = scmp.lt.s32.totalorder %s482, 4
      %s488 = scalar_select %p487, %s482, 4
      %s489 = smul.addr %s488, 8
      %s490 = scalar_lea.vmem %s3, %s489
      %s491 = smul.u32 %s21, 2
      %s492 = sadd.s32 %s491, %s22
      %p493 = scmp.lt.s32.totalorder %s492, 2
      %s494 = scalar_select %p493, %s492, 2
      %s495 = smul.u32 2, %s494
      %s496 = ssub.s32 5, %s495
      %p497 = scmp.lt.s32.totalorder %s496, 2
      %s498 = scalar_select %p497, %s496, 2
      %s499 = smul.u32 128, %s498
      %s500 = smul.u32 2, %s21
      %p501 = scmp.lt.s32.totalorder %s500, 3
      %s502 = scalar_select %p501, %s500, 3
      %s503 = smul.addr %s502, 8
      %s504 = scalar_lea.vmem %s4, %s503
      %s505 = smul.u32 2, %s21
      %s506 = smul.u32 2, %s21
      %p507 = scmp.lt.s32.totalorder %s506, 3
      %s508 = scalar_select %p507, %s506, 3
      %s509 = smul.addr %s508, 8
      %s510 = scalar_lea.vmem %s5, %s509
      %s511 = smul.u32 2, %s21
      %p512 = scmp.eq.s32.totalorder %s22, 0
      // Predicated region
      $region37: #{tpu_custom_call.1} parent=35 // pred_check
        %p513 = pneg %p512
      $region38: #{tpu_custom_call.1} parent=35 // pred_check_branch
        %515 = sbr.rel (%p513) target = $region40
      $region39: #{tpu_custom_call.1} parent=35 // pred_region
        %vm516 = vcmask 7168
        %517 = vst.msk [vmem:[%s504] sm:$0xff] %vm516, 0.0
        %518 = vst.msk [vmem:[%s504 + $0x8] sm:$0xff] %vm516, 0.0
        %vm519 = vcmask 31744
        %520 = vst.msk [vmem:[%s510] sm:$0xff] %vm519, 0.0
        %521 = vst.msk [vmem:[%s510 + $0x8] sm:$0xff] %vm519, 0.0
      $region40: #{tpu_custom_call.1} parent=35 // pred_fallthru
        _
      %v522 = vld [vmem:[%s446] sm:$0xff]
      %v523 = vld [vmem:[%s446 + $0x8] sm:$0xff]
      %v524 = vld [vmem:[%s424] sm:$0xff]
      %v525 = vld [vmem:[%s424 + $0x8] sm:$0xff]
      %vm526 = vcmask 261120
      %v527 = vsel %vm526, %v522, -inf
      %528 = vmax.xlane.f32.xlu0 %v527
      %v529 = vpop.xlane.xlu0 %528
      %v530 = vsel %vm526, %v523, -inf
      %531 = vmax.xlane.f32.xlu0 %v530
      %v532 = vpop.xlane.xlu0 %531
      %v533 = vsub.f32 %v522, %v529
      %v534 = vsub.f32 %v523, %v532
      %v535 = vmul.f32 %v533, 1.442695
      %v536 = vpow.pop %v535
      %v537 = vmul.f32 %v534, 1.442695
      %v538 = vpow.pop %v537
      %v539 = vsel %vm526, %v536, 0.0
      %540 = vadd.xlane.f32.xlu0 %v539
      %v541 = vpop.xlane.xlu0 %540
      %v542 = vsel %vm526, %v538, 0.0
      %543 = vadd.xlane.f32.xlu0 %v542
      %v544 = vpop.xlane.xlu0 %543
      %v545 = vlog2.pop %v541
      %v546 = vmul.f32 %v545, 0.6931472
      %v547 = vlog2.pop %v544
      %v548 = vmul.f32 %v547, 0.6931472
      %v549 = vlaneseq
      %v550 = vand.u32 %v549, 127
      %551 = vset.pattern.permute.xlu0 0
      %552 = vperm.xlu0 %551, %v524
      %v553 = vpop.permute.xlu0 %552
      %554 = vset.pattern.permute.xlu0 0
      %555 = vperm.xlu0 %554, %v525
      %v556 = vpop.permute.xlu0 %555
      %vm557 = vcmp.eq.s32.totalorder %v550, %v553
      %vm558 = vcmp.eq.s32.totalorder %v550, %v556
      %v559 = vsel %vm557, %v533, 0.0
      %v560 = vsel %vm558, %v534, 0.0
      %v561 = vsel %vm526, %v559, 0.0
      %562 = vadd.xlane.f32.xlu0 %v561
      %v563 = vpop.xlane.xlu0 %562
      %v564 = vsel %vm526, %v560, 0.0
      %565 = vadd.xlane.f32.xlu0 %v564
      %v566 = vpop.xlane.xlu0 %565
      %v567 = vsub.f32 %v546, %v563
      %v568 = vsub.f32 %v548, %v566
      %v569 = vld [vmem:[%s468] sm:$0xff]
      %v570 = vld [vmem:[%s468 + $0x8] sm:$0xff]
      %v571 = vld [vmem:[%s490] sm:$0xff]
      %v572 = vld [vmem:[%s490 + $0x8] sm:$0xff]
      %v573 = vsub.f32 %v569, %v571
      %v574 = vsub.f32 %v570, %v572
      %v575 = vmul.f32 %v573, %v573
      %v576 = vmul.f32 %v574, %v574
      %s577 = smul.u32 %s21, 2
      %s578 = sadd.s32 %s577, %s22
      %s579 = smul.u32 %s578, 16
      %v580 = vlaneseq
      %v581 = vshrl.u32 %v580, 7
      %v582 = vadd.s32 %v581, 8
      %v583 = vstv %s579
      %v584 = vadd.s32 %v583, %v581
      %v585 = vadd.s32 %v583, %v582
      %vm586 = vcmp.lt.s32.totalorder %v584, 40
      %vm587 = vcmp.lt.s32.totalorder %v585, 40
      %v588 = vsel %vm586, %v567, 0.0
      %v589 = vsel %vm587, %v568, 0.0
      %v590 = vsel %vm586, 1, 0
      %v591 = vsel %vm587, 1, 0
      %vm592 = vcmp.eq.s32.totalorder %v590, 1
      %vm593 = vcmp.eq.s32.totalorder %v591, 1
      %v594 = vsel %vm592, %v575, 0.0
      %v595 = vsel %vm593, %v576, 0.0
      %v596 = vld [vmem:[%s504] sm:$0xff]
      %v597 = vld [vmem:[%s504 + $0x8] sm:$0xff]
      %v598 = vadd.f32 %v596, %v588
      %v599 = vadd.f32 %v597, %v589
      %vm600 = vcmask 7168
      %601 = vst.msk [vmem:[%s504] sm:$0xff] %vm600, %v598
      %602 = vst.msk [vmem:[%s504 + $0x8] sm:$0xff] %vm600, %v599
      %v603 = vld [vmem:[%s510] sm:$0xff]
      %v604 = vld [vmem:[%s510 + $0x8] sm:$0xff]
      %v605 = vadd.f32 %v603, %v594
      %v606 = vadd.f32 %v604, %v595
      %vm607 = vcmask 31744
      %608 = vst.msk [vmem:[%s510] sm:$0xff] %vm607, %v605
      %609 = vst.msk [vmem:[%s510 + $0x8] sm:$0xff] %vm607, %v606
      %s610 = smul.u32 2, %s21
      %p611 = scmp.lt.s32.totalorder %s610, 3
      %s612 = scalar_select %p611, %s610, 3
      %s613 = smul.addr %s612, 8
      %s614 = scalar_lea.vmem %s4, %s613
      %s615 = smul.u32 2, %s21
      %p616 = scmp.lt.s32.totalorder %s615, 3
      %s617 = scalar_select %p616, %s615, 3
      %s618 = smul.addr %s617, 8
      %s619 = scalar_lea.vmem %s5, %s618
      // Predicated region
      $region41: #{tpu_custom_call.1} parent=35 // pred_check
        %p620 = pneg %p183
      $region42: #{tpu_custom_call.1} parent=35 // pred_check_branch
        %622 = sbr.rel (%p620) target = $region44
      $region43: #{tpu_custom_call.1} parent=35 // pred_region
        %s623 = smul.u32 2, %s21
      $region44: #{tpu_custom_call.1} parent=35 // pred_fallthru
        _
      // Predicated region
      $region45: #{tpu_custom_call.1} parent=35 // pred_check
        %p624 = pneg %p209
      $region46: #{tpu_custom_call.1} parent=35 // pred_check_branch
        %626 = sbr.rel (%p624) target = $region48
      $region47: #{tpu_custom_call.1} parent=35 // pred_region
        %s627 = smul.u32 2, %s21
      $region48: #{tpu_custom_call.1} parent=35 // pred_fallthru
        _
    $region36: #{tpu_custom_call.1} parent=5 // pred_fallthru
      _
    %p628 = scmp.le.s32.totalorder 2, %s12
    // Predicated region
    $region49: #{tpu_custom_call.1} parent=5 // pred_check
      %p629 = pneg %p628
    $region50: #{tpu_custom_call.1} parent=5 // pred_check_branch
      %631 = sbr.rel (%p629) target = $region52
    $region51: #{tpu_custom_call.1} parent=5 // pred_region
      %s632 = ssub.s32 %s12, 2
      // Predicated region
      $region53: #{tpu_custom_call.1} parent=51 // pred_check
        %p633 = pneg %p189
      $region54: #{tpu_custom_call.1} parent=51 // pred_check_branch
        %635 = sbr.rel (%p633) target = $region56
      $region55: #{tpu_custom_call.1} parent=51 // pred_region
        %s636 = smul.u32 2, %s23
        %p637 = scmp.lt.s32.totalorder %s636, 3
        %s638 = scalar_select %p637, %s636, 3
        %s639 = smul.addr %s638, 8
        %s640 = scalar_lea.vmem %s4, %s639
      $region56: #{tpu_custom_call.1} parent=51 // pred_fallthru
        _
      // Predicated region
      $region57: #{tpu_custom_call.1} parent=51 // pred_check
        %p641 = pneg %p215
      $region58: #{tpu_custom_call.1} parent=51 // pred_check_branch
        %643 = sbr.rel (%p641) target = $region60
      $region59: #{tpu_custom_call.1} parent=51 // pred_region
        %s644 = smul.u32 2, %s23
        %p645 = scmp.lt.s32.totalorder %s644, 3
        %s646 = scalar_select %p645, %s644, 3
        %s647 = smul.addr %s646, 8
        %s648 = scalar_lea.vmem %s5, %s647
      $region60: #{tpu_custom_call.1} parent=51 // pred_fallthru
        _
    $region52: #{tpu_custom_call.1} parent=5 // pred_fallthru
      _
  $region6: #{tpu_custom_call.1} parent=0 // loop_footer
    %s16 = sadd.s32 1, %s12
  $region7: #{tpu_custom_call.1} parent=0 // loop_footer_branch
    %11 = sbr.rel target = $region3
  $region8: #{tpu_custom_call.1} parent=0 // loop_exit
    _

</llo_original>
